<compile_context>
chip_gen: v7x
topology: tpu7x:2x2x1
jax: 0.10.0
libtpu: 0.0.40
codegen_flags: <defaults>
</compile_context>

<pallas_src>
import functools
import numpy as np

import jax
import jax.numpy as jnp
from jax import lax
from jax.experimental import pallas as pl
from jax.experimental.pallas import tpu as pltpu

PATCH = 16        # patch size of the stand-in featurizer
DIM = 64          # featurizer feature dim ("self.dim")
KEY_DIM = 32      # JBULearnedRange key_dim
RADIUS = 3
DIAM = 2 * RADIUS + 1
LN_EPS = 1e-5


# ----------------------------- Pallas kernels -----------------------------

def _embed_norm_kernel(x_ref, w_ref, b_ref, g_ref, bb_ref, o_ref):
    # fused featurizer stand-in (patch embed, bf16 operands / f32 accumulate)
    # + ChannelNorm (LayerNorm over C, eps=1e-5)
    y = jnp.dot(x_ref[...], w_ref[...], preferred_element_type=jnp.float32) + b_ref[...]
    mu = jnp.mean(y, axis=-1, keepdims=True)
    yc = y - mu
    var = jnp.mean(yc * yc, axis=-1, keepdims=True)
    o_ref[...] = yc * lax.rsqrt(var + LN_EPS) * g_ref[...] + bb_ref[...]


def _range_proj_kernel(g_ref, w1_ref, b1_ref, w2_ref, b2_ref, o_ref):
    # range_proj: Conv1x1(3->K) -> GELU(exact) -> Dropout2d(eval: identity) -> Conv1x1(K->K)
    # bf16 matmul operands, f32 accumulation, bf16 output (JBU slab dtype).
    h = jnp.dot(g_ref[...], w1_ref[...], preferred_element_type=jnp.float32) + b1_ref[...]
    h = jax.nn.gelu(h, approximate=False)
    o_ref[...] = (jnp.dot(h.astype(jnp.bfloat16), w2_ref[...],
                          preferred_element_type=jnp.float32)
                  + b2_ref[...]).astype(o_ref.dtype)


def _jbu_kernel(pj_hbm, hr_hbm, fw_ref, fb_ref, o_ref,
                pbuf, hbuf, sems, acc_s, *,
                tile_rows, gw, slab_rows, n_row_tiles,
                pos_temp, inv_two_sigma2, apply_fixup):
    # One row tile (tile_rows output rows) of one batch element per grid step.
    # pj_hbm : (B, GHp, GWp, K) bf16 reflect-padded projected guidance   (HBM, pl.ANY)
    # hr_hbm : (B, GHp, GWp, C) bf16 reflect-padded bicubic-2x source    (HBM, pl.ANY)
    # o_ref  : (1, tile_rows, GW*C) f32 lane-dense output block
    b = pl.program_id(0)
    i = pl.program_id(1)
    slot = i % 2
    c = hbuf.shape[-1]

    def issue(row_tile, slot_):
        r0 = row_tile * tile_rows
        pltpu.make_async_copy(pj_hbm.at[b, pl.ds(r0, slab_rows), :, :],
                              pbuf.at[slot_], sems.at[0, slot_]).start()
        pltpu.make_async_copy(hr_hbm.at[b, pl.ds(r0, slab_rows), :, :],
                              hbuf.at[slot_], sems.at[1, slot_]).start()

    # prime the pipeline at the first row tile of every batch element, then keep
    # one haloed row-slab of prefetch in flight (manual double buffering).
    # TODO(synk): chain the prefetch across batch elements and core-split GH so v7x's
    # second TensorCore is used at batch 1 (needs chunk-local priming).
    @pl.when(i == 0)
    def _():
        issue(0, 0)

    @pl.when(i + 1 < n_row_tiles)
    def _():
        issue(i + 1, 1 - slot)

    # wait for the current slabs (src operand of the wait is only used for its shape)
    pltpu.make_async_copy(pj_hbm.at[b, pl.ds(0, slab_rows), :, :],
                          pbuf.at[slot], sems.at[0, slot]).wait()
    pltpu.make_async_copy(hr_hbm.at[b, pl.ds(0, slab_rows), :, :],
                          hbuf.at[slot], sems.at[1, slot]).wait()

    # projected guidance at the tile centre, pre-scaled by the range temperature
    center = (pbuf[slot, pl.ds(RADIUS, tile_rows), :, :][:, RADIUS:RADIUS + gw, :]
              .astype(jnp.float32) * pos_temp)                       # (tile_rows, gw, K)

    # ---- pass 1: all 49 combined logits ----------------------------------------
    # softmax(range)*spatial / sum(...) == softmax(range_logit + log(spatial)), so the
    # spatial kernel is folded in as a compile-time additive constant per offset.
    logits = []
    for dy in range(DIAM):
        p_dy = pbuf[slot, pl.ds(dy, tile_rows), :, :].astype(jnp.float32)
        dyf = dy * (2.0 / (DIAM - 1)) - 1.0
        for dx in range(DIAM):
            dxf = dx * (2.0 / (DIAM - 1)) - 1.0
            log_sp = -(dyf * dyf + dxf * dxf) * inv_two_sigma2       # python float
            q = p_dy[:, dx:dx + gw, :]
            logits.append(jnp.sum(q * center, axis=-1) + log_sp)     # (tile_rows, gw)

    m = logits[0]
    for lg in logits[1:]:
        m = jnp.maximum(m, lg)
    ws = [jnp.exp(lg - m) for lg in logits]                          # 49 EUP exps
    denom = ws[0]
    for w in ws[1:]:
        denom = denom + w
    # denom >= 1 (the max logit contributes exp(0)=1), so no clamp is needed; the EUP
    # approx reciprocal is a documented tolerance-level deviation from exact division.
    inv = pl.reciprocal(denom, approx=True)                          # (tile_rows, gw)

    # ---- pass 2: weighted accumulation; ONE accumulator RMW per dy row offset ----
    for dy in range(DIAM):
        h_dy = hbuf[slot, pl.ds(dy, tile_rows), :, :].astype(jnp.float32)
        contrib = None
        for dx in range(DIAM):
            t = ws[dy * DIAM + dx][..., None] * h_dy[:, dx:dx + gw, :]
            contrib = t if contrib is None else contrib + t
        if dy == 0:
            acc_s[...] = contrib
        else:
            acc_s[...] = acc_s[...] + contrib

    res = acc_s[...] * inv[..., None]                                # (tile_rows, gw, C)

    if apply_fixup:  # static: fused fixup_proj(x) * 0.1 + x on the final JBU level
        flat = res.reshape(tile_rows * gw, c)
        y = jnp.dot(flat.astype(jnp.bfloat16), fw_ref[...],
                    preferred_element_type=jnp.float32) + fb_ref[...]
        res = (y * 0.1 + flat).reshape(tile_rows, gw, c)

    # lane-dense store: last dim gw*C is a multiple of 128 -> unmasked full-width vst
    o_ref[0] = res.reshape(tile_rows, gw * c).astype(o_ref.dtype)


# ------------------------------- wrappers ---------------------------------

def embed_and_norm(x, w, b, g, bb):
    M, Kin = x.shape
    N = w.shape[1]
    tm = M if M <= 1024 else 1024
    return pl.pallas_call(
        _embed_norm_kernel,
        out_shape=jax.ShapeDtypeStruct((M, N), jnp.float32),
        grid=(pl.cdiv(M, tm),),
        in_specs=[pl.BlockSpec((tm, Kin), lambda i: (i, 0)),
                  pl.BlockSpec((Kin, N), lambda i: (0, 0)),
                  pl.BlockSpec((1, N), lambda i: (0, 0)),
                  pl.BlockSpec((1, N), lambda i: (0, 0)),
                  pl.BlockSpec((1, N), lambda i: (0, 0))],
        out_specs=pl.BlockSpec((tm, N), lambda i: (i, 0)),
        compiler_params=pltpu.CompilerParams(dimension_semantics=("parallel",)),
    )(x.astype(jnp.bfloat16), w.astype(jnp.bfloat16), b, g, bb)


def range_proj(gflat, w1, b1, w2, b2):
    M, GC = gflat.shape
    K = w2.shape[1]
    tm = M if M <= 1024 else 1024
    return pl.pallas_call(
        _range_proj_kernel,
        out_shape=jax.ShapeDtypeStruct((M, K), jnp.bfloat16),
        grid=(pl.cdiv(M, tm),),
        in_specs=[pl.BlockSpec((tm, GC), lambda i: (i, 0)),
                  pl.BlockSpec((GC, K), lambda i: (0, 0)),
                  pl.BlockSpec((1, K), lambda i: (0, 0)),
                  pl.BlockSpec((K, K), lambda i: (0, 0)),
                  pl.BlockSpec((1, K), lambda i: (0, 0))],
        out_specs=pl.BlockSpec((tm, K), lambda i: (i, 0)),
        compiler_params=pltpu.CompilerParams(dimension_semantics=("parallel",)),
    )(gflat.astype(jnp.bfloat16), w1.astype(jnp.bfloat16), b1,
      w2.astype(jnp.bfloat16), b2)


def _vmem_limit_bytes():
    # Per-generation VMEM limit: ~96 MiB on v5e/v6e (128 MiB physical), ~48 MiB on v7x
    # (64 MiB physical).  Conservative 48 MiB fallback if the query is unavailable.
    try:
        cap = int(pltpu.get_tpu_info().vmem_capacity_bytes)
    except Exception:
        cap = 64 * 1024 * 1024
    return (cap * 3) // 4


def _pick_tile_rows(gh, gw, gwp, budget):
    # Largest legal row tile whose JBU working set fits the per-generation budget.
    # Legal tiles: multiples of 8 dividing GH (keeps the lane-dense output block inside
    # the (8,128) rule), or GH itself (full-extent block).  Sizes include the 128-lane
    # padding of C=64 / K=32 arrays in VMEM.
    def ru(v, m):
        return ((v + m - 1) // m) * m

    def working_set(tr):
        slab = tr + 2 * RADIUS
        slabs = 2 * (2 * slab * ru(gwp, 16) * 128 * 2)        # bf16 pbuf+hbuf, double-buffered
        acc = tr * ru(gw, 8) * 128 * 4                        # f32 accumulator scratch
        center = tr * ru(gw, 8) * 128 * 4                     # f32 scaled centre guidance
        logits = (DIAM * DIAM) * ru(tr, 8) * ru(gw, 128) * 4  # 49 live f32 logit tiles
        out = 2 * tr * gw * DIM * 4                           # double-buffered output block
        temps = 3 * tr * ru(gwp, 8) * 128 * 4                 # per-dy upcasts + contrib
        return slabs + acc + center + logits + out + temps + (4 << 20)

    cands = [d for d in range(8, min(gh, 64) + 1, 8) if gh % d == 0]
    if gh <= 64:
        cands.append(gh)
    fitting = [d for d in cands if working_set(d) <= budget]
    if fitting:
        return max(fitting)
    if cands:
        return min(cands)
    return gh


def jbu_apply(proj_pad, hr_pad, fix_w, fix_b, *, pos_temp, sigma_spatial, apply_fixup):
    B, GHp, GWp, K = proj_pad.shape
    C = hr_pad.shape[-1]
    GH, GW = GHp - 2 * RADIUS, GWp - 2 * RADIUS

    vmem_limit = _vmem_limit_bytes()
    tile_rows = _pick_tile_rows(GH, GW, GWp, int(vmem_limit * 0.8))
    n_row_tiles = GH // tile_rows
    slab_rows = tile_rows + 2 * RADIUS

    kern = functools.partial(
        _jbu_kernel,
        tile_rows=tile_rows, gw=GW, slab_rows=slab_rows, n_row_tiles=n_row_tiles,
        pos_temp=float(pos_temp),
        inv_two_sigma2=float(1.0 / (2.0 * float(sigma_spatial) ** 2)),
        apply_fixup=apply_fixup)

    out = pl.pallas_call(
        kern,
        out_shape=jax.ShapeDtypeStruct((B, GH, GW * C), jnp.float32),
        grid=(B, n_row_tiles),
        in_specs=[
            pl.BlockSpec(memory_space=pl.ANY),            # padded projected guidance (HBM)
            pl.BlockSpec(memory_space=pl.ANY),            # padded upsampled source    (HBM)
            pl.BlockSpec((C, C), lambda b, i: (0, 0)),    # fixup weight (bf16, tiny)
            pl.BlockSpec((1, C), lambda b, i: (0, 0)),    # fixup bias   (tiny)
        ],
        out_specs=pl.BlockSpec((1, tile_rows, GW * C), lambda b, i: (b, i, 0)),
        scratch_shapes=[
            pltpu.VMEM((2, slab_rows, GWp, K), jnp.bfloat16),   # double-buffered proj slab
            pltpu.VMEM((2, slab_rows, GWp, C), jnp.bfloat16),   # double-buffered hr slab
            pltpu.SemaphoreType.DMA((2, 2)),
            pltpu.VMEM((tile_rows, GW, C), jnp.float32),        # accumulator
        ],
        compiler_params=pltpu.CompilerParams(
            dimension_semantics=("parallel", "arbitrary"),
            vmem_limit_bytes=int(vmem_limit)),
    )(proj_pad, hr_pad, fix_w, fix_b)
    return out.reshape(B, GH, GW, C)


# ------------------------------ JAX glue -----------------------------------

def _cubic_w(d):
    # PyTorch bicubic kernel (a = -0.75)
    ad = jnp.abs(d)
    return jnp.where(ad <= 1.0, (1.25 * ad - 2.25) * ad * ad + 1.0,
           jnp.where(ad < 2.0, ((-0.75 * ad + 3.75) * ad - 6.0) * ad + 3.0, 0.0))


def _up2x_reflect_pad_axis(x, axis, pad):
    # exact 2x bicubic (align_corners=False, edge-clamped taps) that directly emits
    # `pad` reflect-padded border samples, so the padded upsampled tensor is the
    # only materialization (no separate hr + hr_pad).
    n = x.shape[axis]
    m = 2 * n
    o = jnp.arange(m + 2 * pad) - pad
    u = jnp.where(o < 0, -o, o)
    u = jnp.where(u >= m, 2 * (m - 1) - u, u)          # reflect (valid for pad <= m-1)
    k = u // 2
    even = (u % 2) == 0
    f = jnp.where(even, k - 1, k)
    t = jnp.where(even, 0.75, 0.25)
    out = 0.0
    for j in range(4):
        idx = jnp.clip(f - 1 + j, 0, n - 1)
        w = _cubic_w(t + 1.0 - j)
        shape = [1] * x.ndim
        shape[axis] = m + 2 * pad
        out = out + jnp.take(x, idx, axis=axis) * w.reshape(shape)
    return out


def bicubic_up2x_reflect_pad(x_nhwc, pad):
    return _up2x_reflect_pad_axis(_up2x_reflect_pad_axis(x_nhwc, 1, pad), 2, pad)


def adaptive_avg_pool_nhwc(x, oh, ow):
    # exact match of F.adaptive_avg_pool2d when H % oh == 0 and W % ow == 0
    B, H, W, C = x.shape
    assert H % oh == 0 and W % ow == 0, "adaptive pool requires integer stride"
    fh, fw = H // oh, W // ow
    return x.reshape(B, oh, fh, ow, fw, C).mean(axis=(2, 4))


def jbu_upsample(source, guidance_full, p, fix_w, fix_b, apply_fixup):
    B, SH, SW, C = source.shape
    GH, GW = 2 * SH, 2 * SW
    assert GH > RADIUS and GW > RADIUS, "feature map too small for reflect halo"

    small = adaptive_avg_pool_nhwc(guidance_full, GH, GW)
    gpad = jnp.pad(small, ((0, 0), (RADIUS, RADIUS), (RADIUS, RADIUS), (0, 0)),
                   mode="reflect")
    GHp, GWp = GH + 2 * RADIUS, GW + 2 * RADIUS

    # range_proj is pointwise, so projecting the reflect-padded guidance gives the
    # padded projection directly; stored bf16 to halve the JBU slab HBM traffic.
    # TODO(synk): fold this 3->32->32 pointwise MLP and the 2x bicubic upsample into
    # the JBU kernel itself to remove both per-level HBM round-trips entirely.
    proj_pad = range_proj(gpad.reshape(B * GHp * GWp, 3),
                          p["w1"], p["b1"], p["w2"], p["b2"])
    proj_pad = proj_pad.reshape(B, GHp, GWp, KEY_DIM)

    hr_pad = bicubic_up2x_reflect_pad(source, RADIUS).astype(jnp.bfloat16)

    # NOTE: range_temp / sigma_spatial are baked in as trace-time constants (eval only;
    # changing them retriggers compilation).
    pos_temp = float(np.clip(np.exp(p["range_temp"]), 1e-4, 1e4))
    return jbu_apply(proj_pad, hr_pad, fix_w, fix_b,
                     pos_temp=pos_temp, sigma_spatial=p["sigma_spatial"],
                     apply_fixup=apply_fixup)


def upsampled_backbone_forward(image_nchw, params):
    # featurizer (stand-in) + ChannelNorm (use_norm=True), fused into one kernel.
    # TODO(synk): get_featurizer() returns a full pretrained ViT backbone; it is
    # replaced by a single patch-embedding projection with the same output shape.
    x = jnp.transpose(image_nchw, (0, 2, 3, 1)).astype(jnp.float32)     # NHWC guidance
    B, H, W, _ = x.shape
    hp, wp = H // PATCH, W // PATCH
    patches = x.reshape(B, hp, PATCH, wp, PATCH, 3).transpose(0, 1, 3, 2, 4, 5)
    patches = patches.reshape(B * hp * wp, PATCH * PATCH * 3)
    feats = embed_and_norm(patches, params["patch_w"], params["patch_b"],
                           params["ln_g"], params["ln_b"])
    src = feats.reshape(B, hp, wp, DIM)

    fix_w = params["fix_w"].astype(jnp.bfloat16)

    # 'jbu_stack': four chained 2x joint bilateral upsamplers; the last level also
    # applies fixup_proj(x) * 0.1 + x (fused into that level's kernel).
    names = ("up1", "up2", "up3", "up4")
    for idx, name in enumerate(names):
        src = jbu_upsample(src, x, params[name], fix_w, params["fix_b"],
                           apply_fixup=(idx == len(names) - 1))
    return jnp.transpose(src, (0, 3, 1, 2))                              # NCHW output


def init_params(key):
    ks = jax.random.split(key, 8)

    def nrm(k, shape, scale=0.02):
        return scale * jax.random.normal(k, shape, jnp.float32)

    params = {
        "patch_w": nrm(ks[0], (PATCH * PATCH * 3, DIM)),
        "patch_b": nrm(ks[1], (1, DIM)),
        "ln_g": jnp.ones((1, DIM), jnp.float32),   # LayerNorm default init
        "ln_b": jnp.zeros((1, DIM), jnp.float32),
        "fix_w": nrm(ks[2], (DIM, DIM)),
        "fix_b": nrm(ks[3], (1, DIM)),
    }
    for i, name in enumerate(("up1", "up2", "up3", "up4")):
        k1, k2, k3, k4 = jax.random.split(ks[4 + i], 4)
        params[name] = {
            "w1": nrm(k1, (3, KEY_DIM)),
            "b1": nrm(k2, (1, KEY_DIM)),
            "w2": nrm(k3, (KEY_DIM, KEY_DIM)),
            "b2": nrm(k4, (1, KEY_DIM)),
            "range_temp": 0.0,      # nn.Parameter(torch.tensor(0.0))
            "sigma_spatial": 1.0,   # nn.Parameter(torch.tensor(1.0))
        }
    return params


if __name__ == "__main__":
    key = jax.random.PRNGKey(0)
    pkey, xkey = jax.random.split(key)
    params = init_params(pkey)

    # NCHW image; 32x32 exercises all four JBU levels and the full-height-tile path
    image = jax.random.normal(xkey, (2, 3, 32, 32), jnp.float32)

    out = upsampled_backbone_forward(image, params)
    out = jax.block_until_ready(out)
    assert out.shape == (2, DIM, 32, 32), out.shape
    assert bool(jnp.all(jnp.isfinite(out)))
    print("KERNEL_OK")
</pallas_src>

<mosaic_0001>
module attributes {stable_mosaic.version = 11 : i64} {
  func.func @_embed_norm_kernel(%arg0: i32, %arg1: memref<8x768xbf16, #tpu.memory_space<vmem>>, %arg2: memref<768x64xbf16, #tpu.memory_space<vmem>>, %arg3: memref<1x64xf32, #tpu.memory_space<vmem>>, %arg4: memref<1x64xf32, #tpu.memory_space<vmem>>, %arg5: memref<1x64xf32, #tpu.memory_space<vmem>>, %arg6: memref<8x64xf32, #tpu.memory_space<vmem>>) attributes {dimension_semantics = [#tpu.dimension_semantics<parallel>], iteration_bounds = array<i64: 1>, scalar_prefetch = 0 : i64, scratch_operands = 0 : i64, tpu.core_type = #tpu.core_type<tc>, window_params = [{transform_indices = @transform_0, window_bounds = array<i64: 8, 768>}, {pipeline_mode = #tpu.pipeline_mode<synchronous>, transform_indices = @transform_1, window_bounds = array<i64: 768, 64>}, {pipeline_mode = #tpu.pipeline_mode<synchronous>, transform_indices = @transform_2, window_bounds = array<i64: 1, 64>}, {pipeline_mode = #tpu.pipeline_mode<synchronous>, transform_indices = @transform_3, window_bounds = array<i64: 1, 64>}, {pipeline_mode = #tpu.pipeline_mode<synchronous>, transform_indices = @transform_4, window_bounds = array<i64: 1, 64>}, {transform_indices = @transform_5, window_bounds = array<i64: 8, 64>}]} {
    %c0 = arith.constant 0 : index
    %c0_0 = arith.constant 0 : index
    %0 = vector.load %arg1[%c0, %c0_0] : memref<8x768xbf16, #tpu.memory_space<vmem>>, vector<8x768xbf16>
    %c0_1 = arith.constant 0 : index
    %c0_2 = arith.constant 0 : index
    %1 = vector.load %arg2[%c0_1, %c0_2] : memref<768x64xbf16, #tpu.memory_space<vmem>>, vector<768x64xbf16>
    %cst = arith.constant dense<0.000000e+00> : vector<8x64xf32>
    %2 = tpu.matmul %0, %1, %cst {dimension_numbers = #tpu.dot_dimension_numbers<[1], [0], [0], [1], [0, 0, 1, 1], [], []>} : vector<8x768xbf16>, vector<768x64xbf16>, vector<8x64xf32> -> vector<8x64xf32>
    %c0_3 = arith.constant 0 : index
    %c0_4 = arith.constant 0 : index
    %3 = vector.load %arg3[%c0_3, %c0_4] : memref<1x64xf32, #tpu.memory_space<vmem>>, vector<1x64xf32>
    %4 = vector.broadcast %3 : vector<1x64xf32> to vector<8x64xf32>
    %5 = arith.addf %2, %4 : vector<8x64xf32>
    %cst_5 = arith.constant dense<0.000000e+00> : vector<8xf32>
    %6 = vector.multi_reduction <add>, %5, %cst_5 [1] : vector<8x64xf32> to vector<8xf32>
    %7 = vector.shape_cast %6 : vector<8xf32> to vector<8x1xf32>
    %cst_6 = arith.constant 6.400000e+01 : f32
    %8 = vector.broadcast %cst_6 : f32 to vector<8x1xf32>
    %9 = arith.divf %7, %8 : vector<8x1xf32>
    %10 = vector.broadcast %9 : vector<8x1xf32> to vector<8x64xf32>
    %11 = arith.subf %5, %10 : vector<8x64xf32>
    %12 = arith.mulf %11, %11 : vector<8x64xf32>
    %cst_7 = arith.constant dense<0.000000e+00> : vector<8xf32>
    %13 = vector.multi_reduction <add>, %12, %cst_7 [1] : vector<8x64xf32> to vector<8xf32>
    %14 = vector.shape_cast %13 : vector<8xf32> to vector<8x1xf32>
    %cst_8 = arith.constant 6.400000e+01 : f32
    %15 = vector.broadcast %cst_8 : f32 to vector<8x1xf32>
    %16 = arith.divf %14, %15 : vector<8x1xf32>
    %cst_9 = arith.constant 9.99999974E-6 : f32
    %17 = vector.broadcast %cst_9 : f32 to vector<8x1xf32>
    %18 = arith.addf %16, %17 : vector<8x1xf32>
    %19 = math.rsqrt %18 : vector<8x1xf32>
    %20 = vector.broadcast %19 : vector<8x1xf32> to vector<8x64xf32>
    %21 = arith.mulf %11, %20 : vector<8x64xf32>
    %c0_10 = arith.constant 0 : index
    %c0_11 = arith.constant 0 : index
    %22 = vector.load %arg4[%c0_10, %c0_11] : memref<1x64xf32, #tpu.memory_space<vmem>>, vector<1x64xf32>
    %23 = vector.broadcast %22 : vector<1x64xf32> to vector<8x64xf32>
    %24 = arith.mulf %21, %23 : vector<8x64xf32>
    %c0_12 = arith.constant 0 : index
    %c0_13 = arith.constant 0 : index
    %25 = vector.load %arg5[%c0_12, %c0_13] : memref<1x64xf32, #tpu.memory_space<vmem>>, vector<1x64xf32>
    %26 = vector.broadcast %25 : vector<1x64xf32> to vector<8x64xf32>
    %27 = arith.addf %24, %26 : vector<8x64xf32>
    %c0_14 = arith.constant 0 : index
    %c0_15 = arith.constant 0 : index
    %28 = vector.load %arg6[%c0_14, %c0_15] : memref<8x64xf32, #tpu.memory_space<vmem>>, vector<8x64xf32>
    tpu.vector_store %arg6[%c0_14, %c0_15], %27 {strides = array<i32>} : memref<8x64xf32, #tpu.memory_space<vmem>>, vector<8x64xf32>,
    return
  }
  func.func @transform_0(%arg0: i32) -> (i32, i32) {
    %c0_i32 = arith.constant 0 : i32
    %c0_i32_0 = arith.constant 0 : i32
    return %arg0, %c0_i32 : i32, i32
  }
  func.func @transform_1(%arg0: i32) -> (i32, i32) {
    %c0_i32 = arith.constant 0 : i32
    %c0_i32_0 = arith.constant 0 : i32
    %c0_i32_1 = arith.constant 0 : i32
    return %c0_i32, %c0_i32_0 : i32, i32
  }
  func.func @transform_2(%arg0: i32) -> (i32, i32) {
    %c0_i32 = arith.constant 0 : i32
    %c0_i32_0 = arith.constant 0 : i32
    %c0_i32_1 = arith.constant 0 : i32
    return %c0_i32, %c0_i32_0 : i32, i32
  }
  func.func @transform_3(%arg0: i32) -> (i32, i32) {
    %c0_i32 = arith.constant 0 : i32
    %c0_i32_0 = arith.constant 0 : i32
    %c0_i32_1 = arith.constant 0 : i32
    return %c0_i32, %c0_i32_0 : i32, i32
  }
  func.func @transform_4(%arg0: i32) -> (i32, i32) {
    %c0_i32 = arith.constant 0 : i32
    %c0_i32_0 = arith.constant 0 : i32
    %c0_i32_1 = arith.constant 0 : i32
    return %c0_i32, %c0_i32_0 : i32, i32
  }
  func.func @transform_5(%arg0: i32) -> (i32, i32) {
    %c0_i32 = arith.constant 0 : i32
    %c0_i32_0 = arith.constant 0 : i32
    return %arg0, %c0_i32 : i32, i32
  }
}

</mosaic_0001>

<llo_original>
// kernel: tpu_custom_call.1
$region0: #{tpu_custom_call.1}
  #allocation0 [shape = 'u32[]', space=smem, size = 0x4, offset = 0x4, fixed_abs, tag = 'smem constant byte address 0x4 - core index']
  #allocation1 [shape = 'u32[144,128]{1,0:T(1,128)}', space=vmem, size = 0x12000, scoped, tag = 'internal scratch']
  %s0 = inlined_call_operand.vmem [shape: bf16[8,768], index: 0, kind: input, shape index: {}]
  %s1 = inlined_call_operand.vmem [shape: bf16[768,64], index: 1, kind: input, shape index: {}]
  %s2 = inlined_call_operand.vmem [shape: f32[1,64], index: 2, kind: input, shape index: {}]
  %s3 = inlined_call_operand.vmem [shape: f32[1,64], index: 3, kind: input, shape index: {}]
  %s4 = inlined_call_operand.vmem [shape: f32[1,64], index: 4, kind: input, shape index: {}]
  %s5 = inlined_call_operand.hbm [shape: f32[8,64], index: 5, kind: output, shape index: {}]
  %s6 = sld [smem:[#allocation0]]
  $region30: #{tpu_custom_call.1} parent=0
    _
  %s8 = ssub.s32 1, %s6
  %s9 = scalar_select 0, %s8, %s6
  $region1: #{tpu_custom_call.1} parent=0
    #allocation2 [shape = 'u8[4096]{0}', space=vmem, size = 0x1000, scoped, tag = 'output window, operand 0, single buffered']
    #allocation3 [shape = 's32[1]{0}', space=sflag, size = 0x4, scoped, tag = 'scoped memory for tpu_custom_call.1']
    %10 = vsyncpa [#allocation3], 0
    // Predicated region
    $region2: #{tpu_custom_call.1} parent=1 // pred_check
      _
    $region3: #{tpu_custom_call.1} parent=1 // pred_check_branch
      %12 = sbr.rel (0) target = $region5
    $region4: #{tpu_custom_call.1} parent=1 // pred_region
      _
    $region5: #{tpu_custom_call.1} parent=1 // pred_fallthru
      _
    // Predicated region
    $region6: #{tpu_custom_call.1} parent=1 // pred_check
      _
    $region7: #{tpu_custom_call.1} parent=1 // pred_check_branch
      %14 = sbr.rel (0) target = $region9
    $region8: #{tpu_custom_call.1} parent=1 // pred_region
      _
    $region9: #{tpu_custom_call.1} parent=1 // pred_fallthru
      _
    // Predicated region
    $region10: #{tpu_custom_call.1} parent=1 // pred_check
      _
    $region11: #{tpu_custom_call.1} parent=1 // pred_check_branch
      %16 = sbr.rel (0) target = $region13
    $region12: #{tpu_custom_call.1} parent=1 // pred_region
      _
    $region13: #{tpu_custom_call.1} parent=1 // pred_fallthru
      _
    // Predicated region
    $region14: #{tpu_custom_call.1} parent=1 // pred_check
      _
    $region15: #{tpu_custom_call.1} parent=1 // pred_check_branch
      %18 = sbr.rel (0) target = $region17
    $region16: #{tpu_custom_call.1} parent=1 // pred_region
      _
    $region17: #{tpu_custom_call.1} parent=1 // pred_fallthru
      _
    // Predicated region
    $region18: #{tpu_custom_call.1} parent=1 // pred_check
      _
    $region19: #{tpu_custom_call.1} parent=1 // pred_check_branch
      %20 = sbr.rel (0) target = $region21
    $region20: #{tpu_custom_call.1} parent=1 // pred_region
      _
    $region21: #{tpu_custom_call.1} parent=1 // pred_fallthru
      _
    %v22 = vld [vmem:[%s0] sm:$0xff]
    %v23 = vld [vmem:[%s0 + $0x8] sm:$0xff]
    %v24 = vld [vmem:[%s0 + $0x10] sm:$0xff]
    %v25 = vld [vmem:[%s1] sm:$0xf]
    %v26 = vld [vmem:[%s1 + $0x4] sm:$0xf]
    %v27 = vld [vmem:[%s1 + $0x8] sm:$0xf]
    %v28 = vld [vmem:[%s1 + $0xc] sm:$0xf]
    %v29 = vld [vmem:[%s1 + $0x10] sm:$0xf]
    %v30 = vld [vmem:[%s1 + $0x14] sm:$0xf]
    %v31 = vld [vmem:[%s1 + $0x18] sm:$0xf]
    %v32 = vld [vmem:[%s1 + $0x1c] sm:$0xf]
    %v33 = vld [vmem:[%s1 + $0x20] sm:$0xf]
    %v34 = vld [vmem:[%s1 + $0x24] sm:$0xf]
    %v35 = vld [vmem:[%s1 + $0x28] sm:$0xf]
    %v36 = vld [vmem:[%s1 + $0x2c] sm:$0xf]
    %v37 = vld [vmem:[%s1 + $0x30] sm:$0xf]
    %v38 = vld [vmem:[%s1 + $0x34] sm:$0xf]
    %v39 = vld [vmem:[%s1 + $0x38] sm:$0xf]
    %v40 = vld [vmem:[%s1 + $0x3c] sm:$0xf]
    %v41 = vld [vmem:[%s1 + $0x40] sm:$0xf]
    %v42 = vld [vmem:[%s1 + $0x44] sm:$0xf]
    %v43 = vld [vmem:[%s1 + $0x48] sm:$0xf]
    %v44 = vld [vmem:[%s1 + $0x4c] sm:$0xf]
    %v45 = vld [vmem:[%s1 + $0x50] sm:$0xf]
    %v46 = vld [vmem:[%s1 + $0x54] sm:$0xf]
    %v47 = vld [vmem:[%s1 + $0x58] sm:$0xf]
    %v48 = vld [vmem:[%s1 + $0x5c] sm:$0xf]
    %v49 = vld [vmem:[%s1 + $0x60] sm:$0xf]
    %v50 = vld [vmem:[%s1 + $0x64] sm:$0xf]
    %v51 = vld [vmem:[%s1 + $0x68] sm:$0xf]
    %v52 = vld [vmem:[%s1 + $0x6c] sm:$0xf]
    %v53 = vld [vmem:[%s1 + $0x70] sm:$0xf]
    %v54 = vld [vmem:[%s1 + $0x74] sm:$0xf]
    %v55 = vld [vmem:[%s1 + $0x78] sm:$0xf]
    %v56 = vld [vmem:[%s1 + $0x7c] sm:$0xf]
    %v57 = vld [vmem:[%s1 + $0x80] sm:$0xf]
    %v58 = vld [vmem:[%s1 + $0x84] sm:$0xf]
    %v59 = vld [vmem:[%s1 + $0x88] sm:$0xf]
    %v60 = vld [vmem:[%s1 + $0x8c] sm:$0xf]
    %v61 = vld [vmem:[%s1 + $0x90] sm:$0xf]
    %v62 = vld [vmem:[%s1 + $0x94] sm:$0xf]
    %v63 = vld [vmem:[%s1 + $0x98] sm:$0xf]
    %v64 = vld [vmem:[%s1 + $0x9c] sm:$0xf]
    %v65 = vld [vmem:[%s1 + $0xa0] sm:$0xf]
    %v66 = vld [vmem:[%s1 + $0xa4] sm:$0xf]
    %v67 = vld [vmem:[%s1 + $0xa8] sm:$0xf]
    %v68 = vld [vmem:[%s1 + $0xac] sm:$0xf]
    %v69 = vld [vmem:[%s1 + $0xb0] sm:$0xf]
    %v70 = vld [vmem:[%s1 + $0xb4] sm:$0xf]
    %v71 = vld [vmem:[%s1 + $0xb8] sm:$0xf]
    %v72 = vld [vmem:[%s1 + $0xbc] sm:$0xf]
    %v73 = vld [vmem:[%s1 + $0xc0] sm:$0xf]
    %v74 = vld [vmem:[%s1 + $0xc4] sm:$0xf]
    %v75 = vld [vmem:[%s1 + $0xc8] sm:$0xf]
    %v76 = vld [vmem:[%s1 + $0xcc] sm:$0xf]
    %v77 = vld [vmem:[%s1 + $0xd0] sm:$0xf]
    %v78 = vld [vmem:[%s1 + $0xd4] sm:$0xf]
    %v79 = vld [vmem:[%s1 + $0xd8] sm:$0xf]
    %v80 = vld [vmem:[%s1 + $0xdc] sm:$0xf]
    %v81 = vld [vmem:[%s1 + $0xe0] sm:$0xf]
    %v82 = vld [vmem:[%s1 + $0xe4] sm:$0xf]
    %v83 = vld [vmem:[%s1 + $0xe8] sm:$0xf]
    %v84 = vld [vmem:[%s1 + $0xec] sm:$0xf]
    %v85 = vld [vmem:[%s1 + $0xf0] sm:$0xf]
    %v86 = vld [vmem:[%s1 + $0xf4] sm:$0xf]
    %v87 = vld [vmem:[%s1 + $0xf8] sm:$0xf]
    %v88 = vld [vmem:[%s1 + $0xfc] sm:$0xf]
    %v89 = vld [vmem:[%s1 + $0x100] sm:$0xf]
    %v90 = vld [vmem:[%s1 + $0x104] sm:$0xf]
    %v91 = vld [vmem:[%s1 + $0x108] sm:$0xf]
    %v92 = vld [vmem:[%s1 + $0x10c] sm:$0xf]
    %v93 = vld [vmem:[%s1 + $0x110] sm:$0xf]
    %v94 = vld [vmem:[%s1 + $0x114] sm:$0xf]
    %v95 = vld [vmem:[%s1 + $0x118] sm:$0xf]
    %v96 = vld [vmem:[%s1 + $0x11c] sm:$0xf]
    %v97 = vld [vmem:[%s1 + $0x120] sm:$0xf]
    %v98 = vld [vmem:[%s1 + $0x124] sm:$0xf]
    %v99 = vld [vmem:[%s1 + $0x128] sm:$0xf]
    %v100 = vld [vmem:[%s1 + $0x12c] sm:$0xf]
    %v101 = vld [vmem:[%s1 + $0x130] sm:$0xf]
    %v102 = vld [vmem:[%s1 + $0x134] sm:$0xf]
    %v103 = vld [vmem:[%s1 + $0x138] sm:$0xf]
    %v104 = vld [vmem:[%s1 + $0x13c] sm:$0xf]
    %v105 = vld [vmem:[%s1 + $0x140] sm:$0xf]
    %v106 = vld [vmem:[%s1 + $0x144] sm:$0xf]
    %v107 = vld [vmem:[%s1 + $0x148] sm:$0xf]
    %v108 = vld [vmem:[%s1 + $0x14c] sm:$0xf]
    %v109 = vld [vmem:[%s1 + $0x150] sm:$0xf]
    %v110 = vld [vmem:[%s1 + $0x154] sm:$0xf]
    %v111 = vld [vmem:[%s1 + $0x158] sm:$0xf]
    %v112 = vld [vmem:[%s1 + $0x15c] sm:$0xf]
    %v113 = vld [vmem:[%s1 + $0x160] sm:$0xf]
    %v114 = vld [vmem:[%s1 + $0x164] sm:$0xf]
    %v115 = vld [vmem:[%s1 + $0x168] sm:$0xf]
    %v116 = vld [vmem:[%s1 + $0x16c] sm:$0xf]
    %v117 = vld [vmem:[%s1 + $0x170] sm:$0xf]
    %v118 = vld [vmem:[%s1 + $0x174] sm:$0xf]
    %v119 = vld [vmem:[%s1 + $0x178] sm:$0xf]
    %v120 = vld [vmem:[%s1 + $0x17c] sm:$0xf]
    %v121 = vld [vmem:[%s2] sm:$0x1]
    %v123 = vlaneseq
    %v124 = vshrl.u32 %v123, 7
    %v125 = vsub.s32 0, %v124
    %v126 = vrot.slane %v121, %v125
    %v131 = vunpack.c.l.b16 %v22
    %v132 = vunpack.c.h.b16 %v22
    %v133 = vunpack.c.l.b16 %v23
    %v134 = vunpack.c.h.b16 %v23
    %v135 = vunpack.c.l.b16 %v24
    %v136 = vunpack.c.h.b16 %v24
    %v137 = vpack.c.b16 %v131, %v131
    %v138 = vpack.c.b16 %v132, %v132
    %v139 = vpack.c.b16 %v133, %v133
    %v140 = vpack.c.b16 %v134, %v134
    %v141 = vpack.c.b16 %v135, %v135
    %v142 = vpack.c.b16 %v136, %v136
    %v245 = vunpack.c.l.b16 %v25
    %v246 = vunpack.c.l.b16 %v26
    %v247 = vunpack.c.l.b16 %v27
    %v248 = vunpack.c.l.b16 %v28
    %v249 = vunpack.c.l.b16 %v29
    %v250 = vunpack.c.l.b16 %v30
    %v251 = vunpack.c.l.b16 %v31
    %v252 = vunpack.c.l.b16 %v32
    %v253 = vunpack.c.l.b16 %v33
    %v254 = vunpack.c.l.b16 %v34
    %v255 = vunpack.c.l.b16 %v35
    %v256 = vunpack.c.l.b16 %v36
    %v257 = vunpack.c.l.b16 %v37
    %v258 = vunpack.c.l.b16 %v38
    %v259 = vunpack.c.l.b16 %v39
    %v260 = vunpack.c.l.b16 %v40
    %v261 = vunpack.c.l.b16 %v41
    %v262 = vunpack.c.l.b16 %v42
    %v263 = vunpack.c.l.b16 %v43
    %v264 = vunpack.c.l.b16 %v44
    %v265 = vunpack.c.l.b16 %v45
    %v266 = vunpack.c.l.b16 %v46
    %v267 = vunpack.c.l.b16 %v47
    %v268 = vunpack.c.l.b16 %v48
    %v269 = vunpack.c.l.b16 %v49
    %v270 = vunpack.c.l.b16 %v50
    %v271 = vunpack.c.l.b16 %v51
    %v272 = vunpack.c.l.b16 %v52
    %v273 = vunpack.c.l.b16 %v53
    %v274 = vunpack.c.l.b16 %v54
    %v275 = vunpack.c.l.b16 %v55
    %v276 = vunpack.c.l.b16 %v56
    %v277 = vunpack.c.l.b16 %v57
    %v278 = vunpack.c.l.b16 %v58
    %v279 = vunpack.c.l.b16 %v59
    %v280 = vunpack.c.l.b16 %v60
    %v281 = vunpack.c.l.b16 %v61
    %v282 = vunpack.c.l.b16 %v62
    %v283 = vunpack.c.l.b16 %v63
    %v284 = vunpack.c.l.b16 %v64
    %v285 = vunpack.c.l.b16 %v65
    %v286 = vunpack.c.l.b16 %v66
    %v287 = vunpack.c.l.b16 %v67
    %v288 = vunpack.c.l.b16 %v68
    %v289 = vunpack.c.l.b16 %v69
    %v290 = vunpack.c.l.b16 %v70
    %v291 = vunpack.c.l.b16 %v71
    %v292 = vunpack.c.l.b16 %v72
    %v293 = vunpack.c.l.b16 %v73
    %v294 = vunpack.c.l.b16 %v74
    %v295 = vunpack.c.l.b16 %v75
    %v296 = vunpack.c.l.b16 %v76
    %v297 = vunpack.c.l.b16 %v77
    %v298 = vunpack.c.l.b16 %v78
    %v299 = vunpack.c.l.b16 %v79
    %v300 = vunpack.c.l.b16 %v80
    %v301 = vunpack.c.l.b16 %v81
    %v302 = vunpack.c.l.b16 %v82
    %v303 = vunpack.c.l.b16 %v83
    %v304 = vunpack.c.l.b16 %v84
    %v305 = vunpack.c.l.b16 %v85
    %v306 = vunpack.c.l.b16 %v86
    %v307 = vunpack.c.l.b16 %v87
    %v308 = vunpack.c.l.b16 %v88
    %v309 = vunpack.c.l.b16 %v89
    %v310 = vunpack.c.l.b16 %v90
    %v311 = vunpack.c.l.b16 %v91
    %v312 = vunpack.c.l.b16 %v92
    %v313 = vunpack.c.l.b16 %v93
    %v314 = vunpack.c.l.b16 %v94
    %v315 = vunpack.c.l.b16 %v95
    %v316 = vunpack.c.l.b16 %v96
    %v317 = vunpack.c.l.b16 %v97
    %v318 = vunpack.c.l.b16 %v98
    %v319 = vunpack.c.l.b16 %v99
    %v320 = vunpack.c.l.b16 %v100
    %v321 = vunpack.c.l.b16 %v101
    %v322 = vunpack.c.l.b16 %v102
    %v323 = vunpack.c.l.b16 %v103
    %v324 = vunpack.c.l.b16 %v104
    %v325 = vunpack.c.l.b16 %v105
    %v326 = vunpack.c.l.b16 %v106
    %v327 = vunpack.c.l.b16 %v107
    %v328 = vunpack.c.l.b16 %v108
    %v329 = vunpack.c.l.b16 %v109
    %v330 = vunpack.c.l.b16 %v110
    %v331 = vunpack.c.l.b16 %v111
    %v332 = vunpack.c.l.b16 %v112
    %v333 = vunpack.c.l.b16 %v113
    %v334 = vunpack.c.l.b16 %v114
    %v335 = vunpack.c.l.b16 %v115
    %v336 = vunpack.c.l.b16 %v116
    %v337 = vunpack.c.l.b16 %v117
    %v338 = vunpack.c.l.b16 %v118
    %v339 = vunpack.c.l.b16 %v119
    %v340 = vunpack.c.l.b16 %v120
    %v341 = vpack.c.b16 %v246, %v245
    %v342 = vpack.c.b16 %v248, %v247
    %v343 = vpack.c.b16 %v250, %v249
    %v344 = vpack.c.b16 %v252, %v251
    %v345 = vpack.c.b16 %v254, %v253
    %v346 = vpack.c.b16 %v256, %v255
    %v347 = vpack.c.b16 %v258, %v257
    %v348 = vpack.c.b16 %v260, %v259
    %v349 = vpack.c.b16 %v262, %v261
    %v350 = vpack.c.b16 %v264, %v263
    %v351 = vpack.c.b16 %v266, %v265
    %v352 = vpack.c.b16 %v268, %v267
    %v353 = vpack.c.b16 %v270, %v269
    %v354 = vpack.c.b16 %v272, %v271
    %v355 = vpack.c.b16 %v274, %v273
    %v356 = vpack.c.b16 %v276, %v275
    %v357 = vpack.c.b16 %v278, %v277
    %v358 = vpack.c.b16 %v280, %v279
    %v359 = vpack.c.b16 %v282, %v281
    %v360 = vpack.c.b16 %v284, %v283
    %v361 = vpack.c.b16 %v286, %v285
    %v362 = vpack.c.b16 %v288, %v287
    %v363 = vpack.c.b16 %v290, %v289
    %v364 = vpack.c.b16 %v292, %v291
    %v365 = vpack.c.b16 %v294, %v293
    %v366 = vpack.c.b16 %v296, %v295
    %v367 = vpack.c.b16 %v298, %v297
    %v368 = vpack.c.b16 %v300, %v299
    %v369 = vpack.c.b16 %v302, %v301
    %v370 = vpack.c.b16 %v304, %v303
    %v371 = vpack.c.b16 %v306, %v305
    %v372 = vpack.c.b16 %v308, %v307
    %v373 = vpack.c.b16 %v310, %v309
    %v374 = vpack.c.b16 %v312, %v311
    %v375 = vpack.c.b16 %v314, %v313
    %v376 = vpack.c.b16 %v316, %v315
    %v377 = vpack.c.b16 %v318, %v317
    %v378 = vpack.c.b16 %v320, %v319
    %v379 = vpack.c.b16 %v322, %v321
    %v380 = vpack.c.b16 %v324, %v323
    %v381 = vpack.c.b16 %v326, %v325
    %v382 = vpack.c.b16 %v328, %v327
    %v383 = vpack.c.b16 %v330, %v329
    %v384 = vpack.c.b16 %v332, %v331
    %v385 = vpack.c.b16 %v334, %v333
    %v386 = vpack.c.b16 %v336, %v335
    %v387 = vpack.c.b16 %v338, %v337
    %v388 = vpack.c.b16 %v340, %v339
    %437 = vmatprep.subr.bf16.mxu0 0
    %438 = vmatpush1.bf16.msra.mxu0 %v341
    %439 = vmatprep.subr.bf16.mxu0 0
    %440 = vmatpush1.bf16.msra.mxu0 %v342
    %441 = vmatprep.subr.bf16.mxu0 0
    %442 = vmatpush1.bf16.msra.mxu0 %v343
    %443 = vmatprep.subr.bf16.mxu0 0
    %444 = vmatpush1.bf16.msra.mxu0 %v344
    %445 = vmatprep.subr.bf16.mxu0 0
    %446 = vmatpush1.bf16.msra.mxu0 %v345
    %447 = vmatprep.subr.bf16.mxu0 0
    %448 = vmatpush1.bf16.msra.mxu0 %v346
    %449 = vmatprep.subr.bf16.mxu0 0
    %450 = vmatpush1.bf16.msra.mxu0 %v347
    %451 = vmatprep.subr.bf16.mxu0 0
    %452 = vmatpush1.bf16.msra.mxu0 %v348
    %453 = vmatprep.subr.bf16.mxu0 0
    %454 = vmatpush1.bf16.msra.mxu0 %v349
    %455 = vmatprep.subr.bf16.mxu0 0
    %456 = vmatpush1.bf16.msra.mxu0 %v350
    %457 = vmatprep.subr.bf16.mxu0 0
    %458 = vmatpush1.bf16.msra.mxu0 %v351
    %459 = vmatprep.subr.bf16.mxu0 0
    %460 = vmatpush1.bf16.msra.mxu0 %v352
    %461 = vmatprep.subr.bf16.mxu0 0
    %462 = vmatpush1.bf16.msra.mxu0 %v353
    %463 = vmatprep.subr.bf16.mxu0 0
    %464 = vmatpush1.bf16.msra.mxu0 %v354
    %465 = vmatprep.subr.bf16.mxu0 0
    %466 = vmatpush1.bf16.msra.mxu0 %v355
    %467 = vmatprep.subr.bf16.mxu0 0
    %468 = vmatpush1.bf16.msra.mxu0 %v356
    %469 = vmatprep.mubr.bf16.mxu0 %v138
    %470 = vmatmul.mubr.bf16.gmra.mrb[0].mxu0 %v137
    %v471 = vpop.f32.mrb[0].mxu0
    %v472 = vadd.f32 %v126, %v471
    %v473 = vpop.f32.mrb[0].mxu0
    %v474 = vpop.f32.mrb[0].mxu0
    %v475 = vpop.f32.mrb[0].mxu0
    %476 = vdwg.mxu0
    %477 = vmatprep.subr.bf16.mxu0 0
    %478 = vmatpush1.bf16.msra.mxu0 %v357
    %479 = vmatprep.subr.bf16.mxu0 0
    %480 = vmatpush1.bf16.msra.mxu0 %v358
    %481 = vmatprep.subr.bf16.mxu0 0
    %482 = vmatpush1.bf16.msra.mxu0 %v359
    %483 = vmatprep.subr.bf16.mxu0 0
    %484 = vmatpush1.bf16.msra.mxu0 %v360
    %485 = vmatprep.subr.bf16.mxu0 0
    %486 = vmatpush1.bf16.msra.mxu0 %v361
    %487 = vmatprep.subr.bf16.mxu0 0
    %488 = vmatpush1.bf16.msra.mxu0 %v362
    %489 = vmatprep.subr.bf16.mxu0 0
    %490 = vmatpush1.bf16.msra.mxu0 %v363
    %491 = vmatprep.subr.bf16.mxu0 0
    %492 = vmatpush1.bf16.msra.mxu0 %v364
    %493 = vmatprep.subr.bf16.mxu0 0
    %494 = vmatpush1.bf16.msra.mxu0 %v365
    %495 = vmatprep.subr.bf16.mxu0 0
    %496 = vmatpush1.bf16.msra.mxu0 %v366
    %497 = vmatprep.subr.bf16.mxu0 0
    %498 = vmatpush1.bf16.msra.mxu0 %v367
    %499 = vmatprep.subr.bf16.mxu0 0
    %500 = vmatpush1.bf16.msra.mxu0 %v368
    %501 = vmatprep.subr.bf16.mxu0 0
    %502 = vmatpush1.bf16.msra.mxu0 %v369
    %503 = vmatprep.subr.bf16.mxu0 0
    %504 = vmatpush1.bf16.msra.mxu0 %v370
    %505 = vmatprep.subr.bf16.mxu0 0
    %506 = vmatpush1.bf16.msra.mxu0 %v371
    %507 = vmatprep.subr.bf16.mxu0 0
    %508 = vmatpush1.bf16.msra.mxu0 %v372
    %509 = vmatprep.mubr.bf16.mxu0 %v140
    %510 = vmatmul.mubr.bf16.gmra.mrb[0].mxu0 %v139
    %v511 = vpop.f32.mrb[0].mxu0
    %v512 = vadd.f32 %v472, %v511
    %v513 = vpop.f32.mrb[0].mxu0
    %v514 = vpop.f32.mrb[0].mxu0
    %v515 = vpop.f32.mrb[0].mxu0
    %516 = vdwg.mxu0
    %517 = vmatprep.subr.bf16.mxu0 0
    %518 = vmatpush1.bf16.msra.mxu0 %v373
    %519 = vmatprep.subr.bf16.mxu0 0
    %520 = vmatpush1.bf16.msra.mxu0 %v374
    %521 = vmatprep.subr.bf16.mxu0 0
    %522 = vmatpush1.bf16.msra.mxu0 %v375
    %523 = vmatprep.subr.bf16.mxu0 0
    %524 = vmatpush1.bf16.msra.mxu0 %v376
    %525 = vmatprep.subr.bf16.mxu0 0
    %526 = vmatpush1.bf16.msra.mxu0 %v377
    %527 = vmatprep.subr.bf16.mxu0 0
    %528 = vmatpush1.bf16.msra.mxu0 %v378
    %529 = vmatprep.subr.bf16.mxu0 0
    %530 = vmatpush1.bf16.msra.mxu0 %v379
    %531 = vmatprep.subr.bf16.mxu0 0
    %532 = vmatpush1.bf16.msra.mxu0 %v380
    %533 = vmatprep.subr.bf16.mxu0 0
    %534 = vmatpush1.bf16.msra.mxu0 %v381
    %535 = vmatprep.subr.bf16.mxu0 0
    %536 = vmatpush1.bf16.msra.mxu0 %v382
    %537 = vmatprep.subr.bf16.mxu0 0
    %538 = vmatpush1.bf16.msra.mxu0 %v383
    %539 = vmatprep.subr.bf16.mxu0 0
    %540 = vmatpush1.bf16.msra.mxu0 %v384
    %541 = vmatprep.subr.bf16.mxu0 0
    %542 = vmatpush1.bf16.msra.mxu0 %v385
    %543 = vmatprep.subr.bf16.mxu0 0
    %544 = vmatpush1.bf16.msra.mxu0 %v386
    %545 = vmatprep.subr.bf16.mxu0 0
    %546 = vmatpush1.bf16.msra.mxu0 %v387
    %547 = vmatprep.subr.bf16.mxu0 0
    %548 = vmatpush1.bf16.msra.mxu0 %v388
    %549 = vmatprep.mubr.bf16.mxu0 %v142
    %550 = vmatmul.mubr.bf16.gmra.mrb[0].mxu0 %v141
    %v551 = vpop.f32.mrb[0].mxu0
    %v552 = vadd.f32 %v512, %v551
    %v553 = vpop.f32.mrb[0].mxu0
    %v554 = vpop.f32.mrb[0].mxu0
    %v555 = vpop.f32.mrb[0].mxu0
    %556 = vdwg.mxu0
    %vm557 = vcmask 523264
    %v558 = vsel %vm557, %v552, 0.0
    %559 = vadd.xlane.f32.xlu0 %v558
    %v560 = vpop.xlane.xlu0 %559
    %v561 = vrcp.pop 64.0
    %v562 = vmul.f32 %v560, %v561
    %v563 = vsub.f32 %v552, %v562
    %v564 = vmul.f32 %v563, %v563
    %v565 = vsel %vm557, %v564, 0.0
    %566 = vadd.xlane.f32.xlu0 %v565
    %v567 = vpop.xlane.xlu0 %566
    %v568 = vmul.f32 %v567, %v561
    %v569 = vadd.f32 %v568, 1e-05
    %v570 = vrsqrt.pop %v569
    %v571 = vmul.f32 %v563, %v570
    %v572 = vld [vmem:[%s3] sm:$0x1]
    %v574 = vlaneseq
    %v575 = vshrl.u32 %v574, 7
    %v576 = vsub.s32 0, %v575
    %v577 = vrot.slane %v572, %v576
    %v579 = vmul.f32 %v571, %v577
    %v580 = vld [vmem:[%s4] sm:$0x1]
    %v582 = vlaneseq
    %v583 = vshrl.u32 %v582, 7
    %v584 = vsub.s32 0, %v583
    %v585 = vrot.slane %v580, %v584
    %v587 = vadd.f32 %v579, %v585
    %588 = vst.msk [vmem:[#allocation2] sm:$0xff] %vm557, %v587
    // Predicated region
    $region22: #{tpu_custom_call.1} parent=1 // pred_check
      _
    $region23: #{tpu_custom_call.1} parent=1 // pred_check_branch
      %590 = sbr.rel (0) target = $region25
    $region24: #{tpu_custom_call.1} parent=1 // pred_region
      %s592 = ssub.s32 128, 128
      %593 = vsyncadd [#allocation3], %s592
      %s595 = sshll.u32 [#allocation2], 4
      %s596 = int_to_ptr.vmem [resolvable:$true] %s595
      %598 = dma.vmem_to_hbm [thread:$0]  %s596, 128, %s5, [#allocation3]
    $region25: #{tpu_custom_call.1} parent=1 // pred_fallthru
      _
    // Predicated region
    $region26: #{tpu_custom_call.1} parent=1 // pred_check
      _
    $region27: #{tpu_custom_call.1} parent=1 // pred_check_branch
      %600 = sbr.rel (0) target = $region29
    $region28: #{tpu_custom_call.1} parent=1 // pred_region
      %601 = dma.done [#allocation3], 128
    $region29: #{tpu_custom_call.1} parent=1 // pred_fallthru
      _
    %602 = vsyncpa [#allocation3], 1

</llo_original>
